<compile_context>
chip_gen: v7x
topology: tpu7x:2x2x1
jax: 0.10.0
libtpu: 0.0.40
codegen_flags: <defaults>
</compile_context>

<pallas_src>
import jax
import jax.numpy as jnp
from jax.experimental import pallas as pl
from jax.experimental.pallas import tpu as pltpu


def mlp_kernel(x_ref, w1_ref, b1_ref, w2_ref, b2_ref, o_ref):
    # hidden = relu(x @ W1 + b1): bf16 operands, f32 accumulate / elementwise.
    h = jnp.dot(x_ref[...], w1_ref[...], preferred_element_type=jnp.float32)
    h = jnp.maximum(h + b1_ref[...], 0.0)
    # logits = hidden @ W2 + b2 (W2 columns zero-padded to a lane-dense 128).
    logits = jnp.dot(h.astype(w2_ref.dtype), w2_ref[...],
                     preferred_element_type=jnp.float32)
    o_ref[...] = (logits + b2_ref[...]).astype(o_ref.dtype)


def mlp_classifier_forward(x_nchw, w1, b1, w2, b2, *, tm_max=256):
    """x_nchw: (b, 3, H, W) -> logits (b, num_classes).

    Flatten matches torch's x.view(b, -1); weights are stored (in, out),
    i.e. transposed relative to torch.nn.Linear.
    """
    b = x_nchw.shape[0]
    x_flat = x_nchw.reshape(b, -1)                      # channel-major flatten
    d = x_flat.shape[1]
    hidden = w1.shape[1]
    num_classes = w2.shape[1]

    # --- lane-dense output: pad class dim up to a multiple of 128 ---
    n_pad = pl.cdiv(num_classes, 128) * 128
    w2_p = jnp.zeros((hidden, n_pad), jnp.bfloat16).at[:, :num_classes].set(
        w2.astype(jnp.bfloat16))
    b2_p = jnp.zeros((1, n_pad), jnp.float32).at[:, :num_classes].set(
        b2.astype(jnp.float32))

    # --- bf16 matmul operands (accumulation stays f32 inside the kernel) ---
    x_bf = x_flat.astype(jnp.bfloat16)
    w1_bf = w1.astype(jnp.bfloat16)
    b1_f = b1.astype(jnp.float32)

    # --- batch tile: multiple of 8 sublanes, capped; pad B to a tile multiple ---
    tm = min(tm_max, pl.cdiv(b, 8) * 8)
    b_pad = pl.cdiv(b, tm) * tm
    if b_pad != b:
        x_bf = jnp.pad(x_bf, ((0, b_pad - b), (0, 0)))

    out = pl.pallas_call(
        mlp_kernel,
        out_shape=jax.ShapeDtypeStruct((b_pad, n_pad), jnp.float32),
        grid=(b_pad // tm,),
        in_specs=[
            pl.BlockSpec((tm, d), lambda i: (i, 0)),          # x: streamed per tile
            pl.BlockSpec((d, hidden), lambda i: (0, 0)),      # W1: VMEM-resident
            pl.BlockSpec((1, hidden), lambda i: (0, 0)),      # b1
            pl.BlockSpec((hidden, n_pad), lambda i: (0, 0)),  # W2 (padded N)
            pl.BlockSpec((1, n_pad), lambda i: (0, 0)),       # b2 (padded N)
        ],
        out_specs=pl.BlockSpec((tm, n_pad), lambda i: (i, 0)),
        compiler_params=pltpu.CompilerParams(
            dimension_semantics=("parallel",)),
    )(x_bf, w1_bf, b1_f, w2_p, b2_p)

    return out[:b, :num_classes]


def init_params(key, input_dim, hidden_dim, num_classes):
    """Deterministic synthetic init (uniform, PyTorch-Linear-style bounds)."""
    k1, k2, k3, k4 = jax.random.split(key, 4)
    bound1 = 1.0 / (input_dim ** 0.5)
    bound2 = 1.0 / (hidden_dim ** 0.5)
    # stored as (in, out) = transpose of torch's (out, in)
    w1 = jax.random.uniform(k1, (input_dim, hidden_dim), jnp.float32, -bound1, bound1)
    b1 = jax.random.uniform(k2, (1, hidden_dim), jnp.float32, -bound1, bound1)
    w2 = jax.random.uniform(k3, (hidden_dim, num_classes), jnp.float32, -bound2, bound2)
    b2 = jax.random.uniform(k4, (1, num_classes), jnp.float32, -bound2, bound2)
    return w1, b1, w2, b2


if __name__ == "__main__":
    # Small demo shapes consistent with the module: 3-channel 16x16 images.
    B, C, H, W = 2, 3, 16, 16
    NUM_CLASSES = 6
    HIDDEN = 128
    INPUT_DIM = C * H * W  # 768 (multiple of 128)

    key = jax.random.PRNGKey(0)
    kx, kp = jax.random.split(key)
    x = jax.random.normal(kx, (B, C, H, W), dtype=jnp.float32)
    w1, b1, w2, b2 = init_params(kp, INPUT_DIM, HIDDEN, NUM_CLASSES)

    logits = mlp_classifier_forward(x, w1, b1, w2, b2)
    logits = jax.block_until_ready(logits)

    # Reference along the same bf16-matmul / f32-accumulate path.
    x_flat = x.reshape(B, -1)
    h_ref = jnp.maximum(
        jnp.dot(x_flat.astype(jnp.bfloat16), w1.astype(jnp.bfloat16),
                preferred_element_type=jnp.float32) + b1, 0.0)
    ref = jnp.dot(h_ref.astype(jnp.bfloat16), w2.astype(jnp.bfloat16),
                  preferred_element_type=jnp.float32) + b2

    assert logits.shape == (B, NUM_CLASSES)
    assert jnp.allclose(logits, ref, atol=2e-2, rtol=2e-2), \
        float(jnp.max(jnp.abs(logits - ref)))

    print("KERNEL_OK")
</pallas_src>

<mosaic_0001>
module attributes {stable_mosaic.version = 11 : i64} {
  func.func @mlp_kernel(%arg0: i32, %arg1: memref<8x768xbf16, #tpu.memory_space<vmem>>, %arg2: memref<768x128xbf16, #tpu.memory_space<vmem>>, %arg3: memref<1x128xf32, #tpu.memory_space<vmem>>, %arg4: memref<128x128xbf16, #tpu.memory_space<vmem>>, %arg5: memref<1x128xf32, #tpu.memory_space<vmem>>, %arg6: memref<8x128xf32, #tpu.memory_space<vmem>>) attributes {dimension_semantics = [#tpu.dimension_semantics<parallel>], iteration_bounds = array<i64: 1>, scalar_prefetch = 0 : i64, scratch_operands = 0 : i64, tpu.core_type = #tpu.core_type<tc>, window_params = [{transform_indices = @transform_0, window_bounds = array<i64: 8, 768>}, {pipeline_mode = #tpu.pipeline_mode<synchronous>, transform_indices = @transform_1, window_bounds = array<i64: 768, 128>}, {pipeline_mode = #tpu.pipeline_mode<synchronous>, transform_indices = @transform_2, window_bounds = array<i64: 1, 128>}, {pipeline_mode = #tpu.pipeline_mode<synchronous>, transform_indices = @transform_3, window_bounds = array<i64: 128, 128>}, {pipeline_mode = #tpu.pipeline_mode<synchronous>, transform_indices = @transform_4, window_bounds = array<i64: 1, 128>}, {transform_indices = @transform_5, window_bounds = array<i64: 8, 128>}]} {
    %c0 = arith.constant 0 : index
    %c0_0 = arith.constant 0 : index
    %0 = vector.load %arg1[%c0, %c0_0] : memref<8x768xbf16, #tpu.memory_space<vmem>>, vector<8x768xbf16>
    %c0_1 = arith.constant 0 : index
    %c0_2 = arith.constant 0 : index
    %1 = vector.load %arg2[%c0_1, %c0_2] : memref<768x128xbf16, #tpu.memory_space<vmem>>, vector<768x128xbf16>
    %cst = arith.constant dense<0.000000e+00> : vector<8x128xf32>
    %2 = tpu.matmul %0, %1, %cst {dimension_numbers = #tpu.dot_dimension_numbers<[1], [0], [0], [1], [0, 0, 1, 1], [], []>} : vector<8x768xbf16>, vector<768x128xbf16>, vector<8x128xf32> -> vector<8x128xf32>
    %c0_3 = arith.constant 0 : index
    %c0_4 = arith.constant 0 : index
    %3 = vector.load %arg3[%c0_3, %c0_4] : memref<1x128xf32, #tpu.memory_space<vmem>>, vector<1x128xf32>
    %4 = vector.broadcast %3 : vector<1x128xf32> to vector<8x128xf32>
    %5 = arith.addf %2, %4 : vector<8x128xf32>
    %cst_5 = arith.constant 0.000000e+00 : f32
    %6 = vector.broadcast %cst_5 : f32 to vector<8x128xf32>
    %7 = arith.maximumf %5, %6 : vector<8x128xf32>
    %8 = arith.truncf %7 : vector<8x128xf32> to vector<8x128xbf16>
    %c0_6 = arith.constant 0 : index
    %c0_7 = arith.constant 0 : index
    %9 = vector.load %arg4[%c0_6, %c0_7] : memref<128x128xbf16, #tpu.memory_space<vmem>>, vector<128x128xbf16>
    %cst_8 = arith.constant dense<0.000000e+00> : vector<8x128xf32>
    %10 = tpu.matmul %8, %9, %cst_8 {dimension_numbers = #tpu.dot_dimension_numbers<[1], [0], [0], [1], [0, 0, 1, 1], [], []>} : vector<8x128xbf16>, vector<128x128xbf16>, vector<8x128xf32> -> vector<8x128xf32>
    %c0_9 = arith.constant 0 : index
    %c0_10 = arith.constant 0 : index
    %11 = vector.load %arg5[%c0_9, %c0_10] : memref<1x128xf32, #tpu.memory_space<vmem>>, vector<1x128xf32>
    %12 = vector.broadcast %11 : vector<1x128xf32> to vector<8x128xf32>
    %13 = arith.addf %10, %12 : vector<8x128xf32>
    %c0_11 = arith.constant 0 : index
    %c0_12 = arith.constant 0 : index
    %14 = vector.load %arg6[%c0_11, %c0_12] : memref<8x128xf32, #tpu.memory_space<vmem>>, vector<8x128xf32>
    tpu.vector_store %arg6[%c0_11, %c0_12], %13 {strides = array<i32>} : memref<8x128xf32, #tpu.memory_space<vmem>>, vector<8x128xf32>,
    return
  }
  func.func @transform_0(%arg0: i32) -> (i32, i32) {
    %c0_i32 = arith.constant 0 : i32
    %c0_i32_0 = arith.constant 0 : i32
    return %arg0, %c0_i32 : i32, i32
  }
  func.func @transform_1(%arg0: i32) -> (i32, i32) {
    %c0_i32 = arith.constant 0 : i32
    %c0_i32_0 = arith.constant 0 : i32
    %c0_i32_1 = arith.constant 0 : i32
    return %c0_i32, %c0_i32_0 : i32, i32
  }
  func.func @transform_2(%arg0: i32) -> (i32, i32) {
    %c0_i32 = arith.constant 0 : i32
    %c0_i32_0 = arith.constant 0 : i32
    %c0_i32_1 = arith.constant 0 : i32
    return %c0_i32, %c0_i32_0 : i32, i32
  }
  func.func @transform_3(%arg0: i32) -> (i32, i32) {
    %c0_i32 = arith.constant 0 : i32
    %c0_i32_0 = arith.constant 0 : i32
    %c0_i32_1 = arith.constant 0 : i32
    return %c0_i32, %c0_i32_0 : i32, i32
  }
  func.func @transform_4(%arg0: i32) -> (i32, i32) {
    %c0_i32 = arith.constant 0 : i32
    %c0_i32_0 = arith.constant 0 : i32
    %c0_i32_1 = arith.constant 0 : i32
    return %c0_i32, %c0_i32_0 : i32, i32
  }
  func.func @transform_5(%arg0: i32) -> (i32, i32) {
    %c0_i32 = arith.constant 0 : i32
    %c0_i32_0 = arith.constant 0 : i32
    return %arg0, %c0_i32 : i32, i32
  }
}

</mosaic_0001>

<llo_original>
// kernel: tpu_custom_call.1
$region0: #{tpu_custom_call.1}
  #allocation0 [shape = 'u32[]', space=smem, size = 0x4, offset = 0x4, fixed_abs, tag = 'smem constant byte address 0x4 - core index']
  #allocation1 [shape = 'u32[144,128]{1,0:T(1,128)}', space=vmem, size = 0x12000, scoped, tag = 'internal scratch']
  %s0 = inlined_call_operand.hbm [shape: bf16[8,768], index: 0, kind: input, shape index: {}]
  %s1 = inlined_call_operand.hbm [shape: bf16[768,128], index: 1, kind: input, shape index: {}]
  %s2 = inlined_call_operand.vmem [shape: f32[1,128], index: 2, kind: input, shape index: {}]
  %s3 = inlined_call_operand.hbm [shape: bf16[128,128], index: 3, kind: input, shape index: {}]
  %s4 = inlined_call_operand.vmem [shape: f32[1,128], index: 4, kind: input, shape index: {}]
  %s5 = inlined_call_operand.hbm [shape: f32[8,128], index: 5, kind: output, shape index: {}]
  %s6 = sld [smem:[#allocation0]]
  $region42: #{tpu_custom_call.1} parent=0
    _
  %s8 = ssub.s32 1, %s6
  %s9 = scalar_select 0, %s8, %s6
  $region1: #{tpu_custom_call.1} parent=0
    #allocation2 [shape = 'u8[12288]{0}', space=vmem, size = 0x3000, scoped, tag = 'input window, operand 0, single buffered']
    #allocation3 [shape = 's32[1]{0}', space=sflag, size = 0x4, scoped, tag = 'scoped memory for tpu_custom_call.1']
    #allocation4 [shape = 's32[1]{0}', space=sflag, size = 0x4, scoped, tag = 'scoped memory for tpu_custom_call.1']
    #allocation5 [shape = 'u8[196608]{0}', space=vmem, size = 0x30000, scoped, tag = 'input window, operand 1, single buffered']
    #allocation6 [shape = 's32[1]{0}', space=sflag, size = 0x4, scoped, tag = 'scoped memory for tpu_custom_call.1']
    #allocation7 [shape = 'u8[32768]{0}', space=vmem, size = 0x8000, scoped, tag = 'input window, operand 3, single buffered']
    #allocation8 [shape = 'u8[4096]{0}', space=vmem, size = 0x1000, scoped, tag = 'output window, operand 0, single buffered']
    %10 = vsyncpa [#allocation3], 0
    %11 = vsyncpa [#allocation6], 0
    %12 = vsyncpa [#allocation4], 0
    // Predicated region
    $region2: #{tpu_custom_call.1} parent=1 // pred_check
      _
    $region3: #{tpu_custom_call.1} parent=1 // pred_check_branch
      %14 = sbr.rel (0) target = $region5
    $region4: #{tpu_custom_call.1} parent=1 // pred_region
      %s16 = ssub.s32 384, 384
      %17 = vsyncadd [#allocation3], %s16
      %s19 = sshll.u32 [#allocation2], 4
      %s20 = int_to_ptr.vmem [resolvable:$true] %s19
      %22 = dma.hbm_to_vmem [thread:$0]  %s0, 384, %s20, [#allocation3]
    $region5: #{tpu_custom_call.1} parent=1 // pred_fallthru
      _
    // Predicated region
    $region6: #{tpu_custom_call.1} parent=1 // pred_check
      _
    $region7: #{tpu_custom_call.1} parent=1 // pred_check_branch
      %24 = sbr.rel (0) target = $region9
    $region8: #{tpu_custom_call.1} parent=1 // pred_region
      %s26 = ssub.s32 6144, 6144
      %27 = vsyncadd [#allocation6], %s26
      %s28 = sshll.u32 [#allocation5], 4
      %s29 = int_to_ptr.vmem [resolvable:$true] %s28
      %34 = dma.hbm_to_vmem [thread:$0]  %s1, 6144, %s29, [#allocation6], 64, 64, 4
    $region9: #{tpu_custom_call.1} parent=1 // pred_fallthru
      _
    // Predicated region
    $region10: #{tpu_custom_call.1} parent=1 // pred_check
      _
    $region11: #{tpu_custom_call.1} parent=1 // pred_check_branch
      %36 = sbr.rel (0) target = $region13
    $region12: #{tpu_custom_call.1} parent=1 // pred_region
      _
    $region13: #{tpu_custom_call.1} parent=1 // pred_fallthru
      _
    // Predicated region
    $region14: #{tpu_custom_call.1} parent=1 // pred_check
      _
    $region15: #{tpu_custom_call.1} parent=1 // pred_check_branch
      %38 = sbr.rel (0) target = $region17
    $region16: #{tpu_custom_call.1} parent=1 // pred_region
      %s40 = ssub.s32 1024, 1024
      %41 = vsyncadd [#allocation6], %s40
      %s42 = sshll.u32 [#allocation7], 4
      %s43 = int_to_ptr.vmem [resolvable:$true] %s42
      %48 = dma.hbm_to_vmem [thread:$0]  %s3, 1024, %s43, [#allocation6], 64, 64, 4
    $region17: #{tpu_custom_call.1} parent=1 // pred_fallthru
      _
    // Predicated region
    $region18: #{tpu_custom_call.1} parent=1 // pred_check
      _
    $region19: #{tpu_custom_call.1} parent=1 // pred_check_branch
      %50 = sbr.rel (0) target = $region21
    $region20: #{tpu_custom_call.1} parent=1 // pred_region
      _
    $region21: #{tpu_custom_call.1} parent=1 // pred_fallthru
      _
    // Predicated region
    $region22: #{tpu_custom_call.1} parent=1 // pred_check
      _
    $region23: #{tpu_custom_call.1} parent=1 // pred_check_branch
      %52 = sbr.rel (0) target = $region25
    $region24: #{tpu_custom_call.1} parent=1 // pred_region
      %53 = dma.done [#allocation3], 384
    $region25: #{tpu_custom_call.1} parent=1 // pred_fallthru
      _
    // Predicated region
    $region26: #{tpu_custom_call.1} parent=1 // pred_check
      _
    $region27: #{tpu_custom_call.1} parent=1 // pred_check_branch
      %55 = sbr.rel (0) target = $region29
    $region28: #{tpu_custom_call.1} parent=1 // pred_region
      %56 = dma.done [#allocation6], 6144
    $region29: #{tpu_custom_call.1} parent=1 // pred_fallthru
      _
    // Predicated region
    $region30: #{tpu_custom_call.1} parent=1 // pred_check
      _
    $region31: #{tpu_custom_call.1} parent=1 // pred_check_branch
      %58 = sbr.rel (0) target = $region33
    $region32: #{tpu_custom_call.1} parent=1 // pred_region
      %59 = dma.done [#allocation6], 1024
    $region33: #{tpu_custom_call.1} parent=1 // pred_fallthru
      _
    %v61 = vld [vmem:[#allocation2] sm:$0xff]
    %v62 = vld [vmem:[#allocation2 + $0x8] sm:$0xff]
    %v63 = vld [vmem:[#allocation2 + $0x10] sm:$0xff]
    %v64 = vld [vmem:[#allocation5] sm:$0xf]
    %v65 = vld [vmem:[#allocation5 + $0x4] sm:$0xf]
    %v66 = vld [vmem:[#allocation5 + $0x8] sm:$0xf]
    %v67 = vld [vmem:[#allocation5 + $0xc] sm:$0xf]
    %v68 = vld [vmem:[#allocation5 + $0x10] sm:$0xf]
    %v69 = vld [vmem:[#allocation5 + $0x14] sm:$0xf]
    %v70 = vld [vmem:[#allocation5 + $0x18] sm:$0xf]
    %v71 = vld [vmem:[#allocation5 + $0x1c] sm:$0xf]
    %v72 = vld [vmem:[#allocation5 + $0x20] sm:$0xf]
    %v73 = vld [vmem:[#allocation5 + $0x24] sm:$0xf]
    %v74 = vld [vmem:[#allocation5 + $0x28] sm:$0xf]
    %v75 = vld [vmem:[#allocation5 + $0x2c] sm:$0xf]
    %v76 = vld [vmem:[#allocation5 + $0x30] sm:$0xf]
    %v77 = vld [vmem:[#allocation5 + $0x34] sm:$0xf]
    %v78 = vld [vmem:[#allocation5 + $0x38] sm:$0xf]
    %v79 = vld [vmem:[#allocation5 + $0x3c] sm:$0xf]
    %v80 = vld [vmem:[#allocation5 + $0x40] sm:$0xf]
    %v81 = vld [vmem:[#allocation5 + $0x44] sm:$0xf]
    %v82 = vld [vmem:[#allocation5 + $0x48] sm:$0xf]
    %v83 = vld [vmem:[#allocation5 + $0x4c] sm:$0xf]
    %v84 = vld [vmem:[#allocation5 + $0x50] sm:$0xf]
    %v85 = vld [vmem:[#allocation5 + $0x54] sm:$0xf]
    %v86 = vld [vmem:[#allocation5 + $0x58] sm:$0xf]
    %v87 = vld [vmem:[#allocation5 + $0x5c] sm:$0xf]
    %v88 = vld [vmem:[#allocation5 + $0x60] sm:$0xf]
    %v89 = vld [vmem:[#allocation5 + $0x64] sm:$0xf]
    %v90 = vld [vmem:[#allocation5 + $0x68] sm:$0xf]
    %v91 = vld [vmem:[#allocation5 + $0x6c] sm:$0xf]
    %v92 = vld [vmem:[#allocation5 + $0x70] sm:$0xf]
    %v93 = vld [vmem:[#allocation5 + $0x74] sm:$0xf]
    %v94 = vld [vmem:[#allocation5 + $0x78] sm:$0xf]
    %v95 = vld [vmem:[#allocation5 + $0x7c] sm:$0xf]
    %v96 = vld [vmem:[#allocation5 + $0x80] sm:$0xf]
    %v97 = vld [vmem:[#allocation5 + $0x84] sm:$0xf]
    %v98 = vld [vmem:[#allocation5 + $0x88] sm:$0xf]
    %v99 = vld [vmem:[#allocation5 + $0x8c] sm:$0xf]
    %v100 = vld [vmem:[#allocation5 + $0x90] sm:$0xf]
    %v101 = vld [vmem:[#allocation5 + $0x94] sm:$0xf]
    %v102 = vld [vmem:[#allocation5 + $0x98] sm:$0xf]
    %v103 = vld [vmem:[#allocation5 + $0x9c] sm:$0xf]
    %v104 = vld [vmem:[#allocation5 + $0xa0] sm:$0xf]
    %v105 = vld [vmem:[#allocation5 + $0xa4] sm:$0xf]
    %v106 = vld [vmem:[#allocation5 + $0xa8] sm:$0xf]
    %v107 = vld [vmem:[#allocation5 + $0xac] sm:$0xf]
    %v108 = vld [vmem:[#allocation5 + $0xb0] sm:$0xf]
    %v109 = vld [vmem:[#allocation5 + $0xb4] sm:$0xf]
    %v110 = vld [vmem:[#allocation5 + $0xb8] sm:$0xf]
    %v111 = vld [vmem:[#allocation5 + $0xbc] sm:$0xf]
    %v112 = vld [vmem:[#allocation5 + $0xc0] sm:$0xf]
    %v113 = vld [vmem:[#allocation5 + $0xc4] sm:$0xf]
    %v114 = vld [vmem:[#allocation5 + $0xc8] sm:$0xf]
    %v115 = vld [vmem:[#allocation5 + $0xcc] sm:$0xf]
    %v116 = vld [vmem:[#allocation5 + $0xd0] sm:$0xf]
    %v117 = vld [vmem:[#allocation5 + $0xd4] sm:$0xf]
    %v118 = vld [vmem:[#allocation5 + $0xd8] sm:$0xf]
    %v119 = vld [vmem:[#allocation5 + $0xdc] sm:$0xf]
    %v120 = vld [vmem:[#allocation5 + $0xe0] sm:$0xf]
    %v121 = vld [vmem:[#allocation5 + $0xe4] sm:$0xf]
    %v122 = vld [vmem:[#allocation5 + $0xe8] sm:$0xf]
    %v123 = vld [vmem:[#allocation5 + $0xec] sm:$0xf]
    %v124 = vld [vmem:[#allocation5 + $0xf0] sm:$0xf]
    %v125 = vld [vmem:[#allocation5 + $0xf4] sm:$0xf]
    %v126 = vld [vmem:[#allocation5 + $0xf8] sm:$0xf]
    %v127 = vld [vmem:[#allocation5 + $0xfc] sm:$0xf]
    %v128 = vld [vmem:[#allocation5 + $0x100] sm:$0xf]
    %v129 = vld [vmem:[#allocation5 + $0x104] sm:$0xf]
    %v130 = vld [vmem:[#allocation5 + $0x108] sm:$0xf]
    %v131 = vld [vmem:[#allocation5 + $0x10c] sm:$0xf]
    %v132 = vld [vmem:[#allocation5 + $0x110] sm:$0xf]
    %v133 = vld [vmem:[#allocation5 + $0x114] sm:$0xf]
    %v134 = vld [vmem:[#allocation5 + $0x118] sm:$0xf]
    %v135 = vld [vmem:[#allocation5 + $0x11c] sm:$0xf]
    %v136 = vld [vmem:[#allocation5 + $0x120] sm:$0xf]
    %v137 = vld [vmem:[#allocation5 + $0x124] sm:$0xf]
    %v138 = vld [vmem:[#allocation5 + $0x128] sm:$0xf]
    %v139 = vld [vmem:[#allocation5 + $0x12c] sm:$0xf]
    %v140 = vld [vmem:[#allocation5 + $0x130] sm:$0xf]
    %v141 = vld [vmem:[#allocation5 + $0x134] sm:$0xf]
    %v142 = vld [vmem:[#allocation5 + $0x138] sm:$0xf]
    %v143 = vld [vmem:[#allocation5 + $0x13c] sm:$0xf]
    %v144 = vld [vmem:[#allocation5 + $0x140] sm:$0xf]
    %v145 = vld [vmem:[#allocation5 + $0x144] sm:$0xf]
    %v146 = vld [vmem:[#allocation5 + $0x148] sm:$0xf]
    %v147 = vld [vmem:[#allocation5 + $0x14c] sm:$0xf]
    %v148 = vld [vmem:[#allocation5 + $0x150] sm:$0xf]
    %v149 = vld [vmem:[#allocation5 + $0x154] sm:$0xf]
    %v150 = vld [vmem:[#allocation5 + $0x158] sm:$0xf]
    %v151 = vld [vmem:[#allocation5 + $0x15c] sm:$0xf]
    %v152 = vld [vmem:[#allocation5 + $0x160] sm:$0xf]
    %v153 = vld [vmem:[#allocation5 + $0x164] sm:$0xf]
    %v154 = vld [vmem:[#allocation5 + $0x168] sm:$0xf]
    %v155 = vld [vmem:[#allocation5 + $0x16c] sm:$0xf]
    %v156 = vld [vmem:[#allocation5 + $0x170] sm:$0xf]
    %v157 = vld [vmem:[#allocation5 + $0x174] sm:$0xf]
    %v158 = vld [vmem:[#allocation5 + $0x178] sm:$0xf]
    %v159 = vld [vmem:[#allocation5 + $0x17c] sm:$0xf]
    %v160 = vld [vmem:[%s2] sm:$0x1]
    %v162 = vlaneseq
    %v163 = vshrl.u32 %v162, 7
    %v164 = vsub.s32 0, %v163
    %v165 = vrot.slane %v160, %v164
    %v170 = vunpack.c.l.b16 %v61
    %v171 = vunpack.c.h.b16 %v61
    %v172 = vunpack.c.l.b16 %v62
    %v173 = vunpack.c.h.b16 %v62
    %v174 = vunpack.c.l.b16 %v63
    %v175 = vunpack.c.h.b16 %v63
    %v176 = vpack.c.b16 %v170, %v170
    %v177 = vpack.c.b16 %v171, %v171
    %v178 = vpack.c.b16 %v172, %v172
    %v179 = vpack.c.b16 %v173, %v173
    %v180 = vpack.c.b16 %v174, %v174
    %v181 = vpack.c.b16 %v175, %v175
    %v284 = vunpack.c.l.b16 %v64
    %v285 = vunpack.c.l.b16 %v65
    %v286 = vunpack.c.l.b16 %v66
    %v287 = vunpack.c.l.b16 %v67
    %v288 = vunpack.c.l.b16 %v68
    %v289 = vunpack.c.l.b16 %v69
    %v290 = vunpack.c.l.b16 %v70
    %v291 = vunpack.c.l.b16 %v71
    %v292 = vunpack.c.l.b16 %v72
    %v293 = vunpack.c.l.b16 %v73
    %v294 = vunpack.c.l.b16 %v74
    %v295 = vunpack.c.l.b16 %v75
    %v296 = vunpack.c.l.b16 %v76
    %v297 = vunpack.c.l.b16 %v77
    %v298 = vunpack.c.l.b16 %v78
    %v299 = vunpack.c.l.b16 %v79
    %v300 = vunpack.c.l.b16 %v80
    %v301 = vunpack.c.l.b16 %v81
    %v302 = vunpack.c.l.b16 %v82
    %v303 = vunpack.c.l.b16 %v83
    %v304 = vunpack.c.l.b16 %v84
    %v305 = vunpack.c.l.b16 %v85
    %v306 = vunpack.c.l.b16 %v86
    %v307 = vunpack.c.l.b16 %v87
    %v308 = vunpack.c.l.b16 %v88
    %v309 = vunpack.c.l.b16 %v89
    %v310 = vunpack.c.l.b16 %v90
    %v311 = vunpack.c.l.b16 %v91
    %v312 = vunpack.c.l.b16 %v92
    %v313 = vunpack.c.l.b16 %v93
    %v314 = vunpack.c.l.b16 %v94
    %v315 = vunpack.c.l.b16 %v95
    %v316 = vunpack.c.l.b16 %v96
    %v317 = vunpack.c.l.b16 %v97
    %v318 = vunpack.c.l.b16 %v98
    %v319 = vunpack.c.l.b16 %v99
    %v320 = vunpack.c.l.b16 %v100
    %v321 = vunpack.c.l.b16 %v101
    %v322 = vunpack.c.l.b16 %v102
    %v323 = vunpack.c.l.b16 %v103
    %v324 = vunpack.c.l.b16 %v104
    %v325 = vunpack.c.l.b16 %v105
    %v326 = vunpack.c.l.b16 %v106
    %v327 = vunpack.c.l.b16 %v107
    %v328 = vunpack.c.l.b16 %v108
    %v329 = vunpack.c.l.b16 %v109
    %v330 = vunpack.c.l.b16 %v110
    %v331 = vunpack.c.l.b16 %v111
    %v332 = vunpack.c.l.b16 %v112
    %v333 = vunpack.c.l.b16 %v113
    %v334 = vunpack.c.l.b16 %v114
    %v335 = vunpack.c.l.b16 %v115
    %v336 = vunpack.c.l.b16 %v116
    %v337 = vunpack.c.l.b16 %v117
    %v338 = vunpack.c.l.b16 %v118
    %v339 = vunpack.c.l.b16 %v119
    %v340 = vunpack.c.l.b16 %v120
    %v341 = vunpack.c.l.b16 %v121
    %v342 = vunpack.c.l.b16 %v122
    %v343 = vunpack.c.l.b16 %v123
    %v344 = vunpack.c.l.b16 %v124
    %v345 = vunpack.c.l.b16 %v125
    %v346 = vunpack.c.l.b16 %v126
    %v347 = vunpack.c.l.b16 %v127
    %v348 = vunpack.c.l.b16 %v128
    %v349 = vunpack.c.l.b16 %v129
    %v350 = vunpack.c.l.b16 %v130
    %v351 = vunpack.c.l.b16 %v131
    %v352 = vunpack.c.l.b16 %v132
    %v353 = vunpack.c.l.b16 %v133
    %v354 = vunpack.c.l.b16 %v134
    %v355 = vunpack.c.l.b16 %v135
    %v356 = vunpack.c.l.b16 %v136
    %v357 = vunpack.c.l.b16 %v137
    %v358 = vunpack.c.l.b16 %v138
    %v359 = vunpack.c.l.b16 %v139
    %v360 = vunpack.c.l.b16 %v140
    %v361 = vunpack.c.l.b16 %v141
    %v362 = vunpack.c.l.b16 %v142
    %v363 = vunpack.c.l.b16 %v143
    %v364 = vunpack.c.l.b16 %v144
    %v365 = vunpack.c.l.b16 %v145
    %v366 = vunpack.c.l.b16 %v146
    %v367 = vunpack.c.l.b16 %v147
    %v368 = vunpack.c.l.b16 %v148
    %v369 = vunpack.c.l.b16 %v149
    %v370 = vunpack.c.l.b16 %v150
    %v371 = vunpack.c.l.b16 %v151
    %v372 = vunpack.c.l.b16 %v152
    %v373 = vunpack.c.l.b16 %v153
    %v374 = vunpack.c.l.b16 %v154
    %v375 = vunpack.c.l.b16 %v155
    %v376 = vunpack.c.l.b16 %v156
    %v377 = vunpack.c.l.b16 %v157
    %v378 = vunpack.c.l.b16 %v158
    %v379 = vunpack.c.l.b16 %v159
    %v380 = vpack.c.b16 %v285, %v284
    %v381 = vpack.c.b16 %v287, %v286
    %v382 = vpack.c.b16 %v289, %v288
    %v383 = vpack.c.b16 %v291, %v290
    %v384 = vpack.c.b16 %v293, %v292
    %v385 = vpack.c.b16 %v295, %v294
    %v386 = vpack.c.b16 %v297, %v296
    %v387 = vpack.c.b16 %v299, %v298
    %v388 = vpack.c.b16 %v301, %v300
    %v389 = vpack.c.b16 %v303, %v302
    %v390 = vpack.c.b16 %v305, %v304
    %v391 = vpack.c.b16 %v307, %v306
    %v392 = vpack.c.b16 %v309, %v308
    %v393 = vpack.c.b16 %v311, %v310
    %v394 = vpack.c.b16 %v313, %v312
    %v395 = vpack.c.b16 %v315, %v314
    %v396 = vpack.c.b16 %v317, %v316
    %v397 = vpack.c.b16 %v319, %v318
    %v398 = vpack.c.b16 %v321, %v320
    %v399 = vpack.c.b16 %v323, %v322
    %v400 = vpack.c.b16 %v325, %v324
    %v401 = vpack.c.b16 %v327, %v326
    %v402 = vpack.c.b16 %v329, %v328
    %v403 = vpack.c.b16 %v331, %v330
    %v404 = vpack.c.b16 %v333, %v332
    %v405 = vpack.c.b16 %v335, %v334
    %v406 = vpack.c.b16 %v337, %v336
    %v407 = vpack.c.b16 %v339, %v338
    %v408 = vpack.c.b16 %v341, %v340
    %v409 = vpack.c.b16 %v343, %v342
    %v410 = vpack.c.b16 %v345, %v344
    %v411 = vpack.c.b16 %v347, %v346
    %v412 = vpack.c.b16 %v349, %v348
    %v413 = vpack.c.b16 %v351, %v350
    %v414 = vpack.c.b16 %v353, %v352
    %v415 = vpack.c.b16 %v355, %v354
    %v416 = vpack.c.b16 %v357, %v356
    %v417 = vpack.c.b16 %v359, %v358
    %v418 = vpack.c.b16 %v361, %v360
    %v419 = vpack.c.b16 %v363, %v362
    %v420 = vpack.c.b16 %v365, %v364
    %v421 = vpack.c.b16 %v367, %v366
    %v422 = vpack.c.b16 %v369, %v368
    %v423 = vpack.c.b16 %v371, %v370
    %v424 = vpack.c.b16 %v373, %v372
    %v425 = vpack.c.b16 %v375, %v374
    %v426 = vpack.c.b16 %v377, %v376
    %v427 = vpack.c.b16 %v379, %v378
    %476 = vmatprep.subr.bf16.mxu0 0
    %477 = vmatpush1.bf16.msra.mxu0 %v380
    %478 = vmatprep.subr.bf16.mxu0 0
    %479 = vmatpush1.bf16.msra.mxu0 %v381
    %480 = vmatprep.subr.bf16.mxu0 0
    %481 = vmatpush1.bf16.msra.mxu0 %v382
    %482 = vmatprep.subr.bf16.mxu0 0
    %483 = vmatpush1.bf16.msra.mxu0 %v383
    %484 = vmatprep.subr.bf16.mxu0 0
    %485 = vmatpush1.bf16.msra.mxu0 %v384
    %486 = vmatprep.subr.bf16.mxu0 0
    %487 = vmatpush1.bf16.msra.mxu0 %v385
    %488 = vmatprep.subr.bf16.mxu0 0
    %489 = vmatpush1.bf16.msra.mxu0 %v386
    %490 = vmatprep.subr.bf16.mxu0 0
    %491 = vmatpush1.bf16.msra.mxu0 %v387
    %492 = vmatprep.subr.bf16.mxu0 0
    %493 = vmatpush1.bf16.msra.mxu0 %v388
    %494 = vmatprep.subr.bf16.mxu0 0
    %495 = vmatpush1.bf16.msra.mxu0 %v389
    %496 = vmatprep.subr.bf16.mxu0 0
    %497 = vmatpush1.bf16.msra.mxu0 %v390
    %498 = vmatprep.subr.bf16.mxu0 0
    %499 = vmatpush1.bf16.msra.mxu0 %v391
    %500 = vmatprep.subr.bf16.mxu0 0
    %501 = vmatpush1.bf16.msra.mxu0 %v392
    %502 = vmatprep.subr.bf16.mxu0 0
    %503 = vmatpush1.bf16.msra.mxu0 %v393
    %504 = vmatprep.subr.bf16.mxu0 0
    %505 = vmatpush1.bf16.msra.mxu0 %v394
    %506 = vmatprep.subr.bf16.mxu0 0
    %507 = vmatpush1.bf16.msra.mxu0 %v395
    %508 = vmatprep.mubr.bf16.mxu0 %v177
    %509 = vmatmul.mubr.bf16.gmra.mrb[0].mxu0 %v176
    %v510 = vpop.f32.mrb[0].mxu0
    %v511 = vadd.f32 %v165, %v510
    %v512 = vpop.f32.mrb[0].mxu0
    %v513 = vpop.f32.mrb[0].mxu0
    %v514 = vpop.f32.mrb[0].mxu0
    %515 = vdwg.mxu0
    %516 = vmatprep.subr.bf16.mxu0 0
    %517 = vmatpush1.bf16.msra.mxu0 %v396
    %518 = vmatprep.subr.bf16.mxu0 0
    %519 = vmatpush1.bf16.msra.mxu0 %v397
    %520 = vmatprep.subr.bf16.mxu0 0
    %521 = vmatpush1.bf16.msra.mxu0 %v398
    %522 = vmatprep.subr.bf16.mxu0 0
    %523 = vmatpush1.bf16.msra.mxu0 %v399
    %524 = vmatprep.subr.bf16.mxu0 0
    %525 = vmatpush1.bf16.msra.mxu0 %v400
    %526 = vmatprep.subr.bf16.mxu0 0
    %527 = vmatpush1.bf16.msra.mxu0 %v401
    %528 = vmatprep.subr.bf16.mxu0 0
    %529 = vmatpush1.bf16.msra.mxu0 %v402
    %530 = vmatprep.subr.bf16.mxu0 0
    %531 = vmatpush1.bf16.msra.mxu0 %v403
    %532 = vmatprep.subr.bf16.mxu0 0
    %533 = vmatpush1.bf16.msra.mxu0 %v404
    %534 = vmatprep.subr.bf16.mxu0 0
    %535 = vmatpush1.bf16.msra.mxu0 %v405
    %536 = vmatprep.subr.bf16.mxu0 0
    %537 = vmatpush1.bf16.msra.mxu0 %v406
    %538 = vmatprep.subr.bf16.mxu0 0
    %539 = vmatpush1.bf16.msra.mxu0 %v407
    %540 = vmatprep.subr.bf16.mxu0 0
    %541 = vmatpush1.bf16.msra.mxu0 %v408
    %542 = vmatprep.subr.bf16.mxu0 0
    %543 = vmatpush1.bf16.msra.mxu0 %v409
    %544 = vmatprep.subr.bf16.mxu0 0
    %545 = vmatpush1.bf16.msra.mxu0 %v410
    %546 = vmatprep.subr.bf16.mxu0 0
    %547 = vmatpush1.bf16.msra.mxu0 %v411
    %548 = vmatprep.mubr.bf16.mxu0 %v179
    %549 = vmatmul.mubr.bf16.gmra.mrb[0].mxu0 %v178
    %v550 = vpop.f32.mrb[0].mxu0
    %v551 = vadd.f32 %v511, %v550
    %v552 = vpop.f32.mrb[0].mxu0
    %v553 = vpop.f32.mrb[0].mxu0
    %v554 = vpop.f32.mrb[0].mxu0
    %555 = vdwg.mxu0
    %556 = vmatprep.subr.bf16.mxu0 0
    %557 = vmatpush1.bf16.msra.mxu0 %v412
    %558 = vmatprep.subr.bf16.mxu0 0
    %559 = vmatpush1.bf16.msra.mxu0 %v413
    %560 = vmatprep.subr.bf16.mxu0 0
    %561 = vmatpush1.bf16.msra.mxu0 %v414
    %562 = vmatprep.subr.bf16.mxu0 0
    %563 = vmatpush1.bf16.msra.mxu0 %v415
    %564 = vmatprep.subr.bf16.mxu0 0
    %565 = vmatpush1.bf16.msra.mxu0 %v416
    %566 = vmatprep.subr.bf16.mxu0 0
    %567 = vmatpush1.bf16.msra.mxu0 %v417
    %568 = vmatprep.subr.bf16.mxu0 0
    %569 = vmatpush1.bf16.msra.mxu0 %v418
    %570 = vmatprep.subr.bf16.mxu0 0
    %571 = vmatpush1.bf16.msra.mxu0 %v419
    %572 = vmatprep.subr.bf16.mxu0 0
    %573 = vmatpush1.bf16.msra.mxu0 %v420
    %574 = vmatprep.subr.bf16.mxu0 0
    %575 = vmatpush1.bf16.msra.mxu0 %v421
    %576 = vmatprep.subr.bf16.mxu0 0
    %577 = vmatpush1.bf16.msra.mxu0 %v422
    %578 = vmatprep.subr.bf16.mxu0 0
    %579 = vmatpush1.bf16.msra.mxu0 %v423
    %580 = vmatprep.subr.bf16.mxu0 0
    %581 = vmatpush1.bf16.msra.mxu0 %v424
    %582 = vmatprep.subr.bf16.mxu0 0
    %583 = vmatpush1.bf16.msra.mxu0 %v425
    %584 = vmatprep.subr.bf16.mxu0 0
    %585 = vmatpush1.bf16.msra.mxu0 %v426
    %586 = vmatprep.subr.bf16.mxu0 0
    %587 = vmatpush1.bf16.msra.mxu0 %v427
    %588 = vmatprep.mubr.bf16.mxu0 %v181
    %589 = vmatmul.mubr.bf16.gmra.mrb[0].mxu0 %v180
    %v590 = vpop.f32.mrb[0].mxu0
    %v591 = vadd.f32 %v551, %v590
    %v592 = vpop.f32.mrb[0].mxu0
    %v593 = vpop.f32.mrb[0].mxu0
    %v594 = vpop.f32.mrb[0].mxu0
    %595 = vdwg.mxu0
    %v596 = vmax.f32 %v591, 0.0
    %v597 = vpack.c.bf16 %v596, %v596
    %v598 = vld [vmem:[#allocation7] sm:$0xf]
    %v599 = vld [vmem:[#allocation7 + $0x4] sm:$0xf]
    %v600 = vld [vmem:[#allocation7 + $0x8] sm:$0xf]
    %v601 = vld [vmem:[#allocation7 + $0xc] sm:$0xf]
    %v602 = vld [vmem:[#allocation7 + $0x10] sm:$0xf]
    %v603 = vld [vmem:[#allocation7 + $0x14] sm:$0xf]
    %v604 = vld [vmem:[#allocation7 + $0x18] sm:$0xf]
    %v605 = vld [vmem:[#allocation7 + $0x1c] sm:$0xf]
    %v606 = vld [vmem:[#allocation7 + $0x20] sm:$0xf]
    %v607 = vld [vmem:[#allocation7 + $0x24] sm:$0xf]
    %v608 = vld [vmem:[#allocation7 + $0x28] sm:$0xf]
    %v609 = vld [vmem:[#allocation7 + $0x2c] sm:$0xf]
    %v610 = vld [vmem:[#allocation7 + $0x30] sm:$0xf]
    %v611 = vld [vmem:[#allocation7 + $0x34] sm:$0xf]
    %v612 = vld [vmem:[#allocation7 + $0x38] sm:$0xf]
    %v613 = vld [vmem:[#allocation7 + $0x3c] sm:$0xf]
    %v614 = vld [vmem:[%s4] sm:$0x1]
    %v616 = vlaneseq
    %v617 = vshrl.u32 %v616, 7
    %v618 = vsub.s32 0, %v617
    %v619 = vrot.slane %v614, %v618
    %v637 = vunpack.c.l.b16 %v598
    %v638 = vunpack.c.l.b16 %v599
    %v639 = vunpack.c.l.b16 %v600
    %v640 = vunpack.c.l.b16 %v601
    %v641 = vunpack.c.l.b16 %v602
    %v642 = vunpack.c.l.b16 %v603
    %v643 = vunpack.c.l.b16 %v604
    %v644 = vunpack.c.l.b16 %v605
    %v645 = vunpack.c.l.b16 %v606
    %v646 = vunpack.c.l.b16 %v607
    %v647 = vunpack.c.l.b16 %v608
    %v648 = vunpack.c.l.b16 %v609
    %v649 = vunpack.c.l.b16 %v610
    %v650 = vunpack.c.l.b16 %v611
    %v651 = vunpack.c.l.b16 %v612
    %v652 = vunpack.c.l.b16 %v613
    %v653 = vpack.c.b16 %v638, %v637
    %v654 = vpack.c.b16 %v640, %v639
    %v655 = vpack.c.b16 %v642, %v641
    %v656 = vpack.c.b16 %v644, %v643
    %v657 = vpack.c.b16 %v646, %v645
    %v658 = vpack.c.b16 %v648, %v647
    %v659 = vpack.c.b16 %v650, %v649
    %v660 = vpack.c.b16 %v652, %v651
    %669 = vmatprep.subr.bf16.mxu0 0
    %670 = vmatpush1.bf16.msra.mxu0 %v653
    %671 = vmatprep.subr.bf16.mxu0 0
    %672 = vmatpush1.bf16.msra.mxu0 %v654
    %673 = vmatprep.subr.bf16.mxu0 0
    %674 = vmatpush1.bf16.msra.mxu0 %v655
    %675 = vmatprep.subr.bf16.mxu0 0
    %676 = vmatpush1.bf16.msra.mxu0 %v656
    %677 = vmatprep.subr.bf16.mxu0 0
    %678 = vmatpush1.bf16.msra.mxu0 %v657
    %679 = vmatprep.subr.bf16.mxu0 0
    %680 = vmatpush1.bf16.msra.mxu0 %v658
    %681 = vmatprep.subr.bf16.mxu0 0
    %682 = vmatpush1.bf16.msra.mxu0 %v659
    %683 = vmatprep.subr.bf16.mxu0 0
    %684 = vmatpush1.bf16.msra.mxu0 %v660
    %685 = vmatprep.subr.bf16.mxu0 0
    %686 = vmatpush1.bf16.msra.mxu0 0
    %687 = vmatprep.subr.bf16.mxu0 0
    %688 = vmatpush1.bf16.msra.mxu0 0
    %689 = vmatprep.subr.bf16.mxu0 0
    %690 = vmatpush1.bf16.msra.mxu0 0
    %691 = vmatprep.subr.bf16.mxu0 0
    %692 = vmatpush1.bf16.msra.mxu0 0
    %693 = vmatprep.subr.bf16.mxu0 0
    %694 = vmatpush1.bf16.msra.mxu0 0
    %695 = vmatprep.subr.bf16.mxu0 0
    %696 = vmatpush1.bf16.msra.mxu0 0
    %697 = vmatprep.subr.bf16.mxu0 0
    %698 = vmatpush1.bf16.msra.mxu0 0
    %699 = vmatprep.subr.bf16.mxu0 0
    %700 = vmatpush1.bf16.msra.mxu0 0
    %701 = vmatprep.mubr.bf16.mxu0 0
    %702 = vmatmul.mubr.bf16.gmra.mrb[0].mxu0 %v597
    %v703 = vpop.f32.mrb[0].mxu0
    %v704 = vadd.f32 %v619, %v703
    %v705 = vpop.f32.mrb[0].mxu0
    %v706 = vpop.f32.mrb[0].mxu0
    %v707 = vpop.f32.mrb[0].mxu0
    %708 = vdwg.mxu0
    %709 = vst [vmem:[#allocation8] sm:$0xff] %v704
    // Predicated region
    $region34: #{tpu_custom_call.1} parent=1 // pred_check
      _
    $region35: #{tpu_custom_call.1} parent=1 // pred_check_branch
      %711 = sbr.rel (0) target = $region37
    $region36: #{tpu_custom_call.1} parent=1 // pred_region
      %s713 = ssub.s32 128, 128
      %714 = vsyncadd [#allocation4], %s713
      %s716 = sshll.u32 [#allocation8], 4
      %s717 = int_to_ptr.vmem [resolvable:$true] %s716
      %719 = dma.vmem_to_hbm [thread:$0]  %s717, 128, %s5, [#allocation4]
    $region37: #{tpu_custom_call.1} parent=1 // pred_fallthru
      _
    // Predicated region
    $region38: #{tpu_custom_call.1} parent=1 // pred_check
      _
    $region39: #{tpu_custom_call.1} parent=1 // pred_check_branch
      %721 = sbr.rel (0) target = $region41
    $region40: #{tpu_custom_call.1} parent=1 // pred_region
      %722 = dma.done [#allocation4], 128
    $region41: #{tpu_custom_call.1} parent=1 // pred_fallthru
      _
    %723 = vsyncpa [#allocation3], 1
    %724 = vsyncpa [#allocation6], 1
    %725 = vsyncpa [#allocation4], 1

</llo_original>
